<compile_context>
chip_gen: v6e
topology: v6e:2x2x1
jax: 0.10.0
libtpu: 0.0.40
codegen_flags: <defaults>
</compile_context>

<pallas_src>
import functools

import jax
import jax.numpy as jnp
from jax.experimental import pallas as pl
from jax.experimental.pallas import tpu as pltpu

NUM_STATES = 4     # CartPole-v0 observation dim
NUM_ACTIONS = 2    # CartPole-v0 action count
H1 = 50
H2 = 30

LANE = 128         # TPU lane width: all matmul N dims padded to 128
IN_PAD = 8         # NUM_STATES padded to one f32 sublane tile

# Packed parameter buffer layout (rows x 128 lanes, f32). ~136 KiB total.
W1_OFF = 0                    # rows [0,   8): W1 (4x50 real, zero padded)
W2_OFF = W1_OFF + IN_PAD      # rows [8, 136): W2 (50x30 real, zero padded)
W3_OFF = W2_OFF + LANE        # rows [136,264): W3 (30x2 real, zero padded)
BIAS_OFF = W3_OFF + LANE      # rows [264,272): row+0=b1, row+1=b2, row+2=b3
PACK_ROWS = BIAS_OFF + 8      # 272

# Minimum rows per tile before we bother splitting the batch across
# TensorCores on v7x (each TC should get a decent chunk of work).
_MIN_ROWS_PER_CORE_TILE = 128


def _round_up(n, m):
    return ((n + m - 1) // m) * m


def _cdiv(a, b):
    return -(-a // b)


def _cores_per_chip():
    """Best-effort TensorCore count per chip (2 on v7x, 1 on v5e/v6e)."""
    try:
        kind = jax.devices()[0].device_kind.lower()
        return 2 if "v7" in kind else 1
    except Exception:  # pragma: no cover - defensive, never fatal
        return 1


_CORES_PER_CHIP = _cores_per_chip()


def dqn_mlp_kernel(x_ref, p_ref, o_ref):
    x = x_ref[...]                                   # (tb, 8)
    biases = p_ref[BIAS_OFF:BIAS_OFF + 8, :]         # (8, 128): single tile load

    # fc1 + ReLU (padding columns 50..127 remain exactly 0)
    h = jnp.dot(x, p_ref[W1_OFF:W1_OFF + IN_PAD, :],
                preferred_element_type=jnp.float32) + biases[0]
    h = jnp.maximum(h, 0.0)

    # fc2 + ReLU (padding columns 30..127 remain exactly 0)
    h = jnp.dot(h, p_ref[W2_OFF:W2_OFF + LANE, :],
                preferred_element_type=jnp.float32) + biases[1]
    h = jnp.maximum(h, 0.0)

    # fc3: raw Q-values; columns 2..127 stay 0 -> lane-dense (tb, 128) store
    o_ref[...] = jnp.dot(h, p_ref[W3_OFF:W3_OFF + LANE, :],
                         preferred_element_type=jnp.float32) + biases[2]


@functools.partial(jax.jit, static_argnames=("tile_b",))
def dqn_forward(x, packed_params, tile_b=2048):
    """x: (B, NUM_STATES) f32, packed_params: (PACK_ROWS, LANE) f32 -> (B, NUM_ACTIONS) f32."""
    B = x.shape[0]
    b8 = _round_up(max(B, 8), 8)

    # Balance tiles to the batch instead of rounding the batch up to the tile.
    ntiles = _cdiv(b8, tile_b)
    # v7x: use an even number of tiles for large batches so the "parallel"
    # batch axis shards across both TensorCores.  No-op on v5e/v6e.
    if _CORES_PER_CHIP > 1 and b8 >= _CORES_PER_CHIP * _MIN_ROWS_PER_CORE_TILE:
        ntiles = _round_up(ntiles, _CORES_PER_CHIP)
    tb = _round_up(_cdiv(b8, ntiles), 8)   # tile rows, multiple of 8
    b_pad = ntiles * tb

    # Pad batch to ntiles*tb and features 4 -> 8 with a single pad op.
    x_pad = jnp.pad(x.astype(jnp.float32),
                    ((0, b_pad - B), (0, IN_PAD - NUM_STATES)))

    out = pl.pallas_call(
        dqn_mlp_kernel,
        out_shape=jax.ShapeDtypeStruct((b_pad, LANE), jnp.float32),
        grid_spec=pltpu.PrefetchScalarGridSpec(
            num_scalar_prefetch=0,
            grid=(ntiles,),
            in_specs=[
                pl.BlockSpec((tb, IN_PAD), lambda i: (i, 0)),
                # Constant index_map: weights DMA'd once, VMEM-resident across steps.
                pl.BlockSpec((PACK_ROWS, LANE), lambda i: (0, 0)),
            ],
            out_specs=pl.BlockSpec((tb, LANE), lambda i: (i, 0)),
        ),
        compiler_params=pltpu.CompilerParams(dimension_semantics=("parallel",)),
    )(x_pad, packed_params)

    return out[:B, :NUM_ACTIONS]


def pack_params(w1, b1, w2, b2, w3, b3):
    """Pack (in,out)-layout weights + (1,out) biases into one padded f32 buffer.

    NOTE: correctness of the padded lanes in the kernel relies on this
    zero-filled packing; do not hand-pack with nonzero padding.
    """
    p = jnp.zeros((PACK_ROWS, LANE), jnp.float32)
    p = p.at[W1_OFF:W1_OFF + NUM_STATES, :H1].set(w1)
    p = p.at[W2_OFF:W2_OFF + H1, :H2].set(w2)
    p = p.at[W3_OFF:W3_OFF + H2, :NUM_ACTIONS].set(w3)
    p = p.at[BIAS_OFF + 0, :H1].set(b1.reshape(-1))
    p = p.at[BIAS_OFF + 1, :H2].set(b2.reshape(-1))
    p = p.at[BIAS_OFF + 2, :NUM_ACTIONS].set(b3.reshape(-1))
    return p


def init_params(key):
    """Mirror the PyTorch module: weights ~ N(0, 0.1) (per .normal_(0, 0.1));
       biases ~ U(-1/sqrt(fan_in), 1/sqrt(fan_in)) (nn.Linear default, untouched).
       Weights stored as (in, out), i.e. transposed vs nn.Linear."""
    ks = jax.random.split(key, 6)

    def w_init(k, fan_in, fan_out):
        return (0.1 * jax.random.normal(k, (fan_in, fan_out))).astype(jnp.float32)

    def b_init(k, fan_in, fan_out):
        bound = 1.0 / jnp.sqrt(float(fan_in))
        return jax.random.uniform(k, (1, fan_out), minval=-bound, maxval=bound).astype(jnp.float32)

    w1 = w_init(ks[0], NUM_STATES, H1)
    b1 = b_init(ks[1], NUM_STATES, H1)
    w2 = w_init(ks[2], H1, H2)
    b2 = b_init(ks[3], H1, H2)
    w3 = w_init(ks[4], H2, NUM_ACTIONS)
    b3 = b_init(ks[5], H2, NUM_ACTIONS)
    return (w1, b1, w2, b2, w3, b3)


def reference_forward(x, params):
    """Pure-JAX reference (unpacked params) for correctness checking."""
    w1, b1, w2, b2, w3, b3 = params
    h = jnp.maximum(x @ w1 + b1, 0.0)
    h = jnp.maximum(h @ w2 + b2, 0.0)
    return h @ w3 + b3


if __name__ == "__main__":
    key = jax.random.PRNGKey(0)
    pkey, xkey1, xkey2 = jax.random.split(key, 3)

    raw_params = init_params(pkey)
    packed = pack_params(*raw_params)

    # Small per-step batch (8 CartPole observations): single grid step.
    x_small = jax.random.normal(xkey1, (8, NUM_STATES), dtype=jnp.float32)
    out_small = jax.block_until_ready(dqn_forward(x_small, packed))
    ref_small = reference_forward(x_small, raw_params)
    assert out_small.shape == (8, NUM_ACTIONS)
    assert jnp.allclose(out_small, ref_small, atol=1e-4, rtol=1e-4), "mismatch (B=8)"

    # Replay-buffer-sized batch (non-multiple of 8): exercises balanced tiling
    # (304 padded rows, 1 tile on v5e/v6e, 2 x 152-row tiles on v7x).
    x_big = jax.random.normal(xkey2, (300, NUM_STATES), dtype=jnp.float32)
    out_big = jax.block_until_ready(dqn_forward(x_big, packed))
    ref_big = reference_forward(x_big, raw_params)
    assert out_big.shape == (300, NUM_ACTIONS)
    assert jnp.allclose(out_big, ref_big, atol=1e-4, rtol=1e-4), "mismatch (B=300)"

    print("KERNEL_OK")
</pallas_src>

<mosaic_0001>
module attributes {stable_mosaic.version = 11 : i64} {
  func.func @dqn_mlp_kernel(%arg0: i32, %arg1: memref<8x8xf32, #tpu.memory_space<vmem>>, %arg2: memref<272x128xf32, #tpu.memory_space<vmem>>, %arg3: memref<8x128xf32, #tpu.memory_space<vmem>>) attributes {dimension_semantics = [#tpu.dimension_semantics<parallel>], iteration_bounds = array<i64: 1>, scalar_prefetch = 0 : i64, scratch_operands = 0 : i64, tpu.core_type = #tpu.core_type<tc>, window_params = [{transform_indices = @transform_0, window_bounds = array<i64: 8, 8>}, {pipeline_mode = #tpu.pipeline_mode<synchronous>, transform_indices = @transform_1, window_bounds = array<i64: 272, 128>}, {transform_indices = @transform_2, window_bounds = array<i64: 8, 128>}]} {
    %c0 = arith.constant 0 : index
    %c0_0 = arith.constant 0 : index
    %0 = vector.load %arg1[%c0, %c0_0] : memref<8x8xf32, #tpu.memory_space<vmem>>, vector<8x8xf32>
    %c264 = arith.constant 264 : index
    %c0_1 = arith.constant 0 : index
    %1 = vector.load %arg2[%c264, %c0_1] : memref<272x128xf32, #tpu.memory_space<vmem>>, vector<8x128xf32>
    %c0_2 = arith.constant 0 : index
    %c0_3 = arith.constant 0 : index
    %2 = vector.load %arg2[%c0_2, %c0_3] : memref<272x128xf32, #tpu.memory_space<vmem>>, vector<8x128xf32>
    %cst = arith.constant dense<0.000000e+00> : vector<8x128xf32>
    %3 = tpu.matmul %0, %2, %cst {dimension_numbers = #tpu.dot_dimension_numbers<[1], [0], [0], [1], [0, 0, 1, 1], [], []>} : vector<8x8xf32>, vector<8x128xf32>, vector<8x128xf32> -> vector<8x128xf32>
    %4 = vector.extract_strided_slice %1 {offsets = [0, 0], sizes = [1, 128], strides = [1, 1]} : vector<8x128xf32> to vector<1x128xf32>
    %5 = vector.shape_cast %4 : vector<1x128xf32> to vector<128xf32>
    %6 = vector.shape_cast %5 : vector<128xf32> to vector<1x128xf32>
    %7 = vector.broadcast %6 : vector<1x128xf32> to vector<8x128xf32>
    %8 = arith.addf %3, %7 : vector<8x128xf32>
    %cst_4 = arith.constant 0.000000e+00 : f32
    %9 = vector.broadcast %cst_4 : f32 to vector<8x128xf32>
    %10 = arith.maximumf %8, %9 : vector<8x128xf32>
    %c8 = arith.constant 8 : index
    %c0_5 = arith.constant 0 : index
    %11 = vector.load %arg2[%c8, %c0_5] : memref<272x128xf32, #tpu.memory_space<vmem>>, vector<128x128xf32>
    %cst_6 = arith.constant dense<0.000000e+00> : vector<8x128xf32>
    %12 = tpu.matmul %10, %11, %cst_6 {dimension_numbers = #tpu.dot_dimension_numbers<[1], [0], [0], [1], [0, 0, 1, 1], [], []>} : vector<8x128xf32>, vector<128x128xf32>, vector<8x128xf32> -> vector<8x128xf32>
    %13 = vector.extract_strided_slice %1 {offsets = [1, 0], sizes = [1, 128], strides = [1, 1]} : vector<8x128xf32> to vector<1x128xf32>
    %14 = vector.shape_cast %13 : vector<1x128xf32> to vector<128xf32>
    %15 = vector.shape_cast %14 : vector<128xf32> to vector<1x128xf32>
    %16 = vector.broadcast %15 : vector<1x128xf32> to vector<8x128xf32>
    %17 = arith.addf %12, %16 : vector<8x128xf32>
    %cst_7 = arith.constant 0.000000e+00 : f32
    %18 = vector.broadcast %cst_7 : f32 to vector<8x128xf32>
    %19 = arith.maximumf %17, %18 : vector<8x128xf32>
    %c136 = arith.constant 136 : index
    %c0_8 = arith.constant 0 : index
    %20 = vector.load %arg2[%c136, %c0_8] : memref<272x128xf32, #tpu.memory_space<vmem>>, vector<128x128xf32>
    %cst_9 = arith.constant dense<0.000000e+00> : vector<8x128xf32>
    %21 = tpu.matmul %19, %20, %cst_9 {dimension_numbers = #tpu.dot_dimension_numbers<[1], [0], [0], [1], [0, 0, 1, 1], [], []>} : vector<8x128xf32>, vector<128x128xf32>, vector<8x128xf32> -> vector<8x128xf32>
    %22 = vector.extract_strided_slice %1 {offsets = [2, 0], sizes = [1, 128], strides = [1, 1]} : vector<8x128xf32> to vector<1x128xf32>
    %23 = vector.shape_cast %22 : vector<1x128xf32> to vector<128xf32>
    %24 = vector.shape_cast %23 : vector<128xf32> to vector<1x128xf32>
    %25 = vector.broadcast %24 : vector<1x128xf32> to vector<8x128xf32>
    %26 = arith.addf %21, %25 : vector<8x128xf32>
    %c0_10 = arith.constant 0 : index
    %c0_11 = arith.constant 0 : index
    %27 = vector.load %arg3[%c0_10, %c0_11] : memref<8x128xf32, #tpu.memory_space<vmem>>, vector<8x128xf32>
    tpu.vector_store %arg3[%c0_10, %c0_11], %26 {strides = array<i32>} : memref<8x128xf32, #tpu.memory_space<vmem>>, vector<8x128xf32>,
    return
  }
  func.func @transform_0(%arg0: i32) -> (i32, i32) {
    %c0_i32 = arith.constant 0 : i32
    %c0_i32_0 = arith.constant 0 : i32
    return %arg0, %c0_i32 : i32, i32
  }
  func.func @transform_1(%arg0: i32) -> (i32, i32) {
    %c0_i32 = arith.constant 0 : i32
    %c0_i32_0 = arith.constant 0 : i32
    %c0_i32_1 = arith.constant 0 : i32
    return %c0_i32, %c0_i32_0 : i32, i32
  }
  func.func @transform_2(%arg0: i32) -> (i32, i32) {
    %c0_i32 = arith.constant 0 : i32
    %c0_i32_0 = arith.constant 0 : i32
    return %arg0, %c0_i32 : i32, i32
  }
}

</mosaic_0001>

<llo_original>
// kernel: dqn_forward.1
$region0: #{dqn_forward.1}
  #allocation0 [shape = 'u32[]', space=smem, size = 0x4, offset = 0x4, fixed_abs, tag = 'smem constant byte address 0x4 - core index']
  #allocation1 [shape = 'u32[144,128]{1,0:T(1,128)}', space=vmem, size = 0x12000, scoped, tag = 'internal scratch']
  %s0 = inlined_call_operand.vmem [shape: f32[8,8], index: 0, kind: input, shape index: {}]
  %s1 = inlined_call_operand.hbm [shape: f32[272,128], index: 1, kind: input, shape index: {}]
  %s2 = inlined_call_operand.vmem [shape: f32[8,128], index: 2, kind: output, shape index: {}]
  %s3 = sld [smem:[#allocation0]]
  $region22: #{dqn_forward.1} parent=0
    _
  %s5 = ssub.s32 1, %s3
  %s6 = scalar_select 0, %s5, %s3
  $region1: #{dqn_forward.1} parent=0
    #allocation2 [shape = 'u8[139264]{0}', space=vmem, size = 0x22000, scoped, tag = 'input window, operand 1, single buffered']
    #allocation3 [shape = 's32[1]{0}', space=sflag, size = 0x4, scoped, tag = 'scoped memory for dqn_forward.1']
    %7 = vsyncpa [#allocation3], 0
    // Predicated region
    $region2: #{dqn_forward.1} parent=1 // pred_check
      _
    $region3: #{dqn_forward.1} parent=1 // pred_check_branch
      %9 = sbr.rel (0) target = $region5
    $region4: #{dqn_forward.1} parent=1 // pred_region
      _
    $region5: #{dqn_forward.1} parent=1 // pred_fallthru
      _
    // Predicated region
    $region6: #{dqn_forward.1} parent=1 // pred_check
      _
    $region7: #{dqn_forward.1} parent=1 // pred_check_branch
      %11 = sbr.rel (0) target = $region9
    $region8: #{dqn_forward.1} parent=1 // pred_region
      %s13 = ssub.s32 4352, 4352
      %14 = vsyncadd [#allocation3], %s13
      %s15 = sshll.u32 [#allocation2], 4
      %s16 = int_to_ptr.vmem [resolvable:$true] %s15
      %21 = dma.hbm_to_vmem [thread:$0]  %s1, 4352, %s16, [#allocation3], 128, 128, 8
    $region9: #{dqn_forward.1} parent=1 // pred_fallthru
      _
    // Predicated region
    $region10: #{dqn_forward.1} parent=1 // pred_check
      _
    $region11: #{dqn_forward.1} parent=1 // pred_check_branch
      %23 = sbr.rel (0) target = $region13
    $region12: #{dqn_forward.1} parent=1 // pred_region
      %24 = dma.done [#allocation3], 4352
    $region13: #{dqn_forward.1} parent=1 // pred_fallthru
      _
    %v25 = vld [vmem:[%s0] sm:$0xff]
    %v26 = vld [vmem:[#allocation2 + $0x108] sm:$0xff]
    %v27 = vld [vmem:[#allocation2] sm:$0xff]
    %v28 = vlaneseq
    %v29 = vshrl.u32 %v28, 7
    %v30 = vsub.s32 0, %v29
    %v31 = vrot.slane %v26, %v30
    %vm32 = vcmask 64512
    %v34 = vsel %vm32, %v25, 0
    %36 = vmatprep.subr.mxu0 0.0
    %37 = vmatpush1.msra.mxu0 0.0
    %38 = vmatprep.subr.mxu0 0.0
    %39 = vmatpush1.msra.mxu0 0.0
    %40 = vmatprep.subr.mxu0 0.0
    %41 = vmatpush1.msra.mxu0 0.0
    %42 = vmatprep.subr.mxu0 0.0
    %43 = vmatpush1.msra.mxu0 0.0
    %44 = vmatprep.subr.mxu0 0.0
    %45 = vmatpush1.msra.mxu0 0.0
    %46 = vmatprep.subr.mxu0 0.0
    %47 = vmatpush1.msra.mxu0 0.0
    %48 = vmatprep.subr.mxu0 0.0
    %49 = vmatpush1.msra.mxu0 0.0
    %50 = vmatprep.subr.mxu0 0.0
    %51 = vmatpush1.msra.mxu0 0.0
    %52 = vmatprep.subr.mxu0 0.0
    %53 = vmatpush1.msra.mxu0 0.0
    %54 = vmatprep.subr.mxu0 0.0
    %55 = vmatpush1.msra.mxu0 0.0
    %56 = vmatprep.subr.mxu0 0.0
    %57 = vmatpush1.msra.mxu0 0.0
    %58 = vmatprep.subr.mxu0 0.0
    %59 = vmatpush1.msra.mxu0 0.0
    %60 = vmatprep.subr.mxu0 0.0
    %61 = vmatpush1.msra.mxu0 0.0
    %62 = vmatprep.subr.mxu0 0.0
    %63 = vmatpush1.msra.mxu0 0.0
    %64 = vmatprep.subr.mxu0 0.0
    %65 = vmatpush1.msra.mxu0 0.0
    %66 = vmatprep.subr.mxu0 0.0
    %67 = vmatpush1.msra.mxu0 %v27
    %68 = vmatprep.subr.mxu0 0.0
    %69 = vmatpush2.msra.mxu0 0.0
    %70 = vmatprep.subr.mxu0 0.0
    %71 = vmatpush2.msra.mxu0 0.0
    %72 = vmatprep.subr.mxu0 0.0
    %73 = vmatpush2.msra.mxu0 0.0
    %74 = vmatprep.subr.mxu0 0.0
    %75 = vmatpush2.msra.mxu0 0.0
    %76 = vmatprep.subr.mxu0 0.0
    %77 = vmatpush2.msra.mxu0 0.0
    %78 = vmatprep.subr.mxu0 0.0
    %79 = vmatpush2.msra.mxu0 0.0
    %80 = vmatprep.subr.mxu0 0.0
    %81 = vmatpush2.msra.mxu0 0.0
    %82 = vmatprep.subr.mxu0 0.0
    %83 = vmatpush2.msra.mxu0 0.0
    %84 = vmatprep.subr.mxu0 0.0
    %85 = vmatpush2.msra.mxu0 0.0
    %86 = vmatprep.subr.mxu0 0.0
    %87 = vmatpush2.msra.mxu0 0.0
    %88 = vmatprep.subr.mxu0 0.0
    %89 = vmatpush2.msra.mxu0 0.0
    %90 = vmatprep.subr.mxu0 0.0
    %91 = vmatpush2.msra.mxu0 0.0
    %92 = vmatprep.subr.mxu0 0.0
    %93 = vmatpush2.msra.mxu0 0.0
    %94 = vmatprep.subr.mxu0 0.0
    %95 = vmatpush2.msra.mxu0 0.0
    %96 = vmatprep.subr.mxu0 0.0
    %97 = vmatpush2.msra.mxu0 0.0
    %98 = vmatprep.subr.mxu0 0.0
    %99 = vmatpush2.msra.mxu0 0.0
    %100 = vmatprep.mubr.f32.mxu0 0.0
    %101 = vmatmul.mubr.f32.gmra.mxu0 %v34
    %v102 = vpop.f32.mrf.mxu0
    %v103 = vadd.f32 %v31, %v102
    %v104 = vpop.f32.mrf.mxu0
    %105 = vdwg.mxu0
    %v106 = vmax.f32 %v103, 0.0
    %v107 = vld [vmem:[#allocation2 + $0x8] sm:$0xff]
    %v108 = vld [vmem:[#allocation2 + $0x10] sm:$0xff]
    %v109 = vld [vmem:[#allocation2 + $0x18] sm:$0xff]
    %v110 = vld [vmem:[#allocation2 + $0x20] sm:$0xff]
    %v111 = vld [vmem:[#allocation2 + $0x28] sm:$0xff]
    %v112 = vld [vmem:[#allocation2 + $0x30] sm:$0xff]
    %v113 = vld [vmem:[#allocation2 + $0x38] sm:$0xff]
    %v114 = vld [vmem:[#allocation2 + $0x40] sm:$0xff]
    %v115 = vld [vmem:[#allocation2 + $0x48] sm:$0xff]
    %v116 = vld [vmem:[#allocation2 + $0x50] sm:$0xff]
    %v117 = vld [vmem:[#allocation2 + $0x58] sm:$0xff]
    %v118 = vld [vmem:[#allocation2 + $0x60] sm:$0xff]
    %v119 = vld [vmem:[#allocation2 + $0x68] sm:$0xff]
    %v120 = vld [vmem:[#allocation2 + $0x70] sm:$0xff]
    %v121 = vld [vmem:[#allocation2 + $0x78] sm:$0xff]
    %v122 = vld [vmem:[#allocation2 + $0x80] sm:$0xff]
    %v123 = vlaneseq
    %v124 = vshrl.u32 %v123, 7
    %v125 = vsub.s32 1, %v124
    %v126 = vrot.slane %v26, %v125
    %127 = vmatprep.subr.mxu0 0.0
    %128 = vmatpush1.msra.mxu0 %v122
    %129 = vmatprep.subr.mxu0 0.0
    %130 = vmatpush1.msra.mxu0 %v121
    %131 = vmatprep.subr.mxu0 0.0
    %132 = vmatpush1.msra.mxu0 %v120
    %133 = vmatprep.subr.mxu0 0.0
    %134 = vmatpush1.msra.mxu0 %v119
    %135 = vmatprep.subr.mxu0 0.0
    %136 = vmatpush1.msra.mxu0 %v118
    %137 = vmatprep.subr.mxu0 0.0
    %138 = vmatpush1.msra.mxu0 %v117
    %139 = vmatprep.subr.mxu0 0.0
    %140 = vmatpush1.msra.mxu0 %v116
    %141 = vmatprep.subr.mxu0 0.0
    %142 = vmatpush1.msra.mxu0 %v115
    %143 = vmatprep.subr.mxu0 0.0
    %144 = vmatpush1.msra.mxu0 %v114
    %145 = vmatprep.subr.mxu0 0.0
    %146 = vmatpush1.msra.mxu0 %v113
    %147 = vmatprep.subr.mxu0 0.0
    %148 = vmatpush1.msra.mxu0 %v112
    %149 = vmatprep.subr.mxu0 0.0
    %150 = vmatpush1.msra.mxu0 %v111
    %151 = vmatprep.subr.mxu0 0.0
    %152 = vmatpush1.msra.mxu0 %v110
    %153 = vmatprep.subr.mxu0 0.0
    %154 = vmatpush1.msra.mxu0 %v109
    %155 = vmatprep.subr.mxu0 0.0
    %156 = vmatpush1.msra.mxu0 %v108
    %157 = vmatprep.subr.mxu0 0.0
    %158 = vmatpush1.msra.mxu0 %v107
    %159 = vmatprep.subr.mxu0 0.0
    %160 = vmatpush2.msra.mxu0 0.0
    %161 = vmatprep.subr.mxu0 0.0
    %162 = vmatpush2.msra.mxu0 0.0
    %163 = vmatprep.subr.mxu0 0.0
    %164 = vmatpush2.msra.mxu0 0.0
    %165 = vmatprep.subr.mxu0 0.0
    %166 = vmatpush2.msra.mxu0 0.0
    %167 = vmatprep.subr.mxu0 0.0
    %168 = vmatpush2.msra.mxu0 0.0
    %169 = vmatprep.subr.mxu0 0.0
    %170 = vmatpush2.msra.mxu0 0.0
    %171 = vmatprep.subr.mxu0 0.0
    %172 = vmatpush2.msra.mxu0 0.0
    %173 = vmatprep.subr.mxu0 0.0
    %174 = vmatpush2.msra.mxu0 0.0
    %175 = vmatprep.subr.mxu0 0.0
    %176 = vmatpush2.msra.mxu0 0.0
    %177 = vmatprep.subr.mxu0 0.0
    %178 = vmatpush2.msra.mxu0 0.0
    %179 = vmatprep.subr.mxu0 0.0
    %180 = vmatpush2.msra.mxu0 0.0
    %181 = vmatprep.subr.mxu0 0.0
    %182 = vmatpush2.msra.mxu0 0.0
    %183 = vmatprep.subr.mxu0 0.0
    %184 = vmatpush2.msra.mxu0 0.0
    %185 = vmatprep.subr.mxu0 0.0
    %186 = vmatpush2.msra.mxu0 0.0
    %187 = vmatprep.subr.mxu0 0.0
    %188 = vmatpush2.msra.mxu0 0.0
    %189 = vmatprep.subr.mxu0 0.0
    %190 = vmatpush2.msra.mxu0 0.0
    %191 = vmatprep.mubr.f32.mxu0 0.0
    %192 = vmatmul.mubr.f32.gmra.mxu0 %v106
    %v193 = vpop.f32.mrf.mxu0
    %v194 = vadd.f32 %v126, %v193
    %v195 = vpop.f32.mrf.mxu0
    %196 = vdwg.mxu0
    %v197 = vmax.f32 %v194, 0.0
    %v198 = vld [vmem:[#allocation2 + $0x88] sm:$0xff]
    %v199 = vld [vmem:[#allocation2 + $0x90] sm:$0xff]
    %v200 = vld [vmem:[#allocation2 + $0x98] sm:$0xff]
    %v201 = vld [vmem:[#allocation2 + $0xa0] sm:$0xff]
    %v202 = vld [vmem:[#allocation2 + $0xa8] sm:$0xff]
    %v203 = vld [vmem:[#allocation2 + $0xb0] sm:$0xff]
    %v204 = vld [vmem:[#allocation2 + $0xb8] sm:$0xff]
    %v205 = vld [vmem:[#allocation2 + $0xc0] sm:$0xff]
    %v206 = vld [vmem:[#allocation2 + $0xc8] sm:$0xff]
    %v207 = vld [vmem:[#allocation2 + $0xd0] sm:$0xff]
    %v208 = vld [vmem:[#allocation2 + $0xd8] sm:$0xff]
    %v209 = vld [vmem:[#allocation2 + $0xe0] sm:$0xff]
    %v210 = vld [vmem:[#allocation2 + $0xe8] sm:$0xff]
    %v211 = vld [vmem:[#allocation2 + $0xf0] sm:$0xff]
    %v212 = vld [vmem:[#allocation2 + $0xf8] sm:$0xff]
    %v213 = vld [vmem:[#allocation2 + $0x100] sm:$0xff]
    %v214 = vlaneseq
    %v215 = vshrl.u32 %v214, 7
    %v216 = vsub.s32 2, %v215
    %v217 = vrot.slane %v26, %v216
    %218 = vmatprep.subr.mxu0 0.0
    %219 = vmatpush1.msra.mxu0 %v213
    %220 = vmatprep.subr.mxu0 0.0
    %221 = vmatpush1.msra.mxu0 %v212
    %222 = vmatprep.subr.mxu0 0.0
    %223 = vmatpush1.msra.mxu0 %v211
    %224 = vmatprep.subr.mxu0 0.0
    %225 = vmatpush1.msra.mxu0 %v210
    %226 = vmatprep.subr.mxu0 0.0
    %227 = vmatpush1.msra.mxu0 %v209
    %228 = vmatprep.subr.mxu0 0.0
    %229 = vmatpush1.msra.mxu0 %v208
    %230 = vmatprep.subr.mxu0 0.0
    %231 = vmatpush1.msra.mxu0 %v207
    %232 = vmatprep.subr.mxu0 0.0
    %233 = vmatpush1.msra.mxu0 %v206
    %234 = vmatprep.subr.mxu0 0.0
    %235 = vmatpush1.msra.mxu0 %v205
    %236 = vmatprep.subr.mxu0 0.0
    %237 = vmatpush1.msra.mxu0 %v204
    %238 = vmatprep.subr.mxu0 0.0
    %239 = vmatpush1.msra.mxu0 %v203
    %240 = vmatprep.subr.mxu0 0.0
    %241 = vmatpush1.msra.mxu0 %v202
    %242 = vmatprep.subr.mxu0 0.0
    %243 = vmatpush1.msra.mxu0 %v201
    %244 = vmatprep.subr.mxu0 0.0
    %245 = vmatpush1.msra.mxu0 %v200
    %246 = vmatprep.subr.mxu0 0.0
    %247 = vmatpush1.msra.mxu0 %v199
    %248 = vmatprep.subr.mxu0 0.0
    %249 = vmatpush1.msra.mxu0 %v198
    %250 = vmatprep.subr.mxu0 0.0
    %251 = vmatpush2.msra.mxu0 0.0
    %252 = vmatprep.subr.mxu0 0.0
    %253 = vmatpush2.msra.mxu0 0.0
    %254 = vmatprep.subr.mxu0 0.0
    %255 = vmatpush2.msra.mxu0 0.0
    %256 = vmatprep.subr.mxu0 0.0
    %257 = vmatpush2.msra.mxu0 0.0
    %258 = vmatprep.subr.mxu0 0.0
    %259 = vmatpush2.msra.mxu0 0.0
    %260 = vmatprep.subr.mxu0 0.0
    %261 = vmatpush2.msra.mxu0 0.0
    %262 = vmatprep.subr.mxu0 0.0
    %263 = vmatpush2.msra.mxu0 0.0
    %264 = vmatprep.subr.mxu0 0.0
    %265 = vmatpush2.msra.mxu0 0.0
    %266 = vmatprep.subr.mxu0 0.0
    %267 = vmatpush2.msra.mxu0 0.0
    %268 = vmatprep.subr.mxu0 0.0
    %269 = vmatpush2.msra.mxu0 0.0
    %270 = vmatprep.subr.mxu0 0.0
    %271 = vmatpush2.msra.mxu0 0.0
    %272 = vmatprep.subr.mxu0 0.0
    %273 = vmatpush2.msra.mxu0 0.0
    %274 = vmatprep.subr.mxu0 0.0
    %275 = vmatpush2.msra.mxu0 0.0
    %276 = vmatprep.subr.mxu0 0.0
    %277 = vmatpush2.msra.mxu0 0.0
    %278 = vmatprep.subr.mxu0 0.0
    %279 = vmatpush2.msra.mxu0 0.0
    %280 = vmatprep.subr.mxu0 0.0
    %281 = vmatpush2.msra.mxu0 0.0
    %282 = vmatprep.mubr.f32.mxu0 0.0
    %283 = vmatmul.mubr.f32.gmra.mxu0 %v197
    %v284 = vpop.f32.mrf.mxu0
    %v285 = vadd.f32 %v217, %v284
    %v286 = vpop.f32.mrf.mxu0
    %287 = vdwg.mxu0
    %288 = vst [vmem:[%s2] sm:$0xff] %v285
    // Predicated region
    $region14: #{dqn_forward.1} parent=1 // pred_check
      _
    $region15: #{dqn_forward.1} parent=1 // pred_check_branch
      %290 = sbr.rel (0) target = $region17
    $region16: #{dqn_forward.1} parent=1 // pred_region
      _
    $region17: #{dqn_forward.1} parent=1 // pred_fallthru
      _
    // Predicated region
    $region18: #{dqn_forward.1} parent=1 // pred_check
      _
    $region19: #{dqn_forward.1} parent=1 // pred_check_branch
      %292 = sbr.rel (0) target = $region21
    $region20: #{dqn_forward.1} parent=1 // pred_region
      _
    $region21: #{dqn_forward.1} parent=1 // pred_fallthru
      _
    %293 = vsyncpa [#allocation3], 1

</llo_original>
